<compile_context>
chip_gen: v6e
topology: v6e:2x2x1
jax: 0.10.0
libtpu: 0.0.40
codegen_flags: <defaults>
</compile_context>

<pallas_src>
import jax
import jax.numpy as jnp
from jax.experimental import pallas as pl
from jax.experimental.pallas import tpu as pltpu

# ---------------- problem / module hyper-parameters ----------------
B, D, H = 16, 32, 64        # batch, state dim, MLP hidden dim

TERMINAL_T   = 1.0          # sde.terminal_t
SIGMA_DIFF   = 1.41421356   # sde.diff(t, x)  (OU, scalar noise)
SIGMA_PRIOR  = 1.0          # prior  N(0, sigma_prior^2 I)
SIGMA_TARGET = 0.5          # target N(mu, sigma_target^2 I)
MU_TARGET    = 0.3
SCALE_SCORE  = 1.0          # self.scale_score
CLIP_MODEL   = 5.0          # self.clip_model
CLIP_SCORE   = 10.0         # self.clip_score


# ---------------- Pallas kernel (whole forward fused, one batch tile per grid step) ----------------
def lerp_ctrl_kernel(t_ref, x_ref, w1x_ref, w1t_ref, b1_ref, w2_ref, b2_ref, o_ref):
    t = t_ref[...]                                                     # (TB, 1)
    x = x_ref[...]                                                     # (TB, D)

    # --- clipped_base_model: tanh MLP on (x, t), clamp to [-clip_model, clip_model] ---
    h = jnp.dot(x, w1x_ref[...], preferred_element_type=jnp.float32)   # (TB, H) MXU
    h = jnp.tanh(h + t * w1t_ref[...] + b1_ref[...])                   # EUP tanh, VPU adds
    ctrl = jnp.dot(h, w2_ref[...], preferred_element_type=jnp.float32) # (TB, D) MXU
    ctrl = jnp.clip(ctrl + b2_ref[...], -CLIP_MODEL, CLIP_MODEL)

    # --- clipped_interpolated_score: lerp(prior_score, target_score, t/terminal_t), clamp ---
    prior_s  = -x * (1.0 / SIGMA_PRIOR ** 2)
    target_s = -(x - MU_TARGET) * (1.0 / SIGMA_TARGET ** 2)
    w = t * (1.0 / TERMINAL_T)
    interp = prior_s + w * (target_s - prior_s)                        # torch.lerp
    score = SCALE_SCORE * jnp.clip(interp, -CLIP_SCORE, CLIP_SCORE)

    # --- out = ctrl + sde.diff(t, x) * score  (score_model None, hard_constrain False) ---
    o_ref[...] = (ctrl + SIGMA_DIFF * score).astype(o_ref.dtype)


# ---------------- wrapper: one pallas_call, batch-only grid ----------------
def lerp_ctrl_forward(t, x, w1x, w1t, b1, w2, b2, *, tb=512):
    """t: (B,1) f32, x: (B,D) f32 -> (B,D) f32.

    Batch-only grid: x/t/out tiled (TB, .) along batch, weights resident via constant
    index_maps.  At B<=tb this is a single grid step (blocks == full arrays).  For very
    large sampler batches the "parallel" batch axis shards across v7x's two TensorCores.
    """
    n, d = x.shape
    hdim = w1x.shape[1]
    tb = min(tb, n)
    grid = (pl.cdiv(n, tb),)
    return pl.pallas_call(
        lerp_ctrl_kernel,
        out_shape=jax.ShapeDtypeStruct((n, d), jnp.float32),
        grid_spec=pltpu.PrefetchScalarGridSpec(
            num_scalar_prefetch=0,
            grid=grid,
            in_specs=[
                pl.BlockSpec((tb, 1), lambda i: (i, 0)),       # t     (batch-tiled)
                pl.BlockSpec((tb, d), lambda i: (i, 0)),       # x     (batch-tiled)
                pl.BlockSpec((d, hdim), lambda i: (0, 0)),     # W1x   (resident)
                pl.BlockSpec((1, hdim), lambda i: (0, 0)),     # w1t   (resident)
                pl.BlockSpec((1, hdim), lambda i: (0, 0)),     # b1    (resident)
                pl.BlockSpec((hdim, d), lambda i: (0, 0)),     # W2    (resident)
                pl.BlockSpec((1, d), lambda i: (0, 0)),        # b2    (resident)
            ],
            out_specs=pl.BlockSpec((tb, d), lambda i: (i, 0)),
        ),
        compiler_params=pltpu.CompilerParams(
            dimension_semantics=("parallel",)),
    )(t, x, w1x, w1t, b1, w2, b2)


lerp_ctrl_forward_jit = jax.jit(lerp_ctrl_forward)


# ---------------- pure-JAX reference (for self-check) ----------------
def lerp_ctrl_reference(t, x, w1x, w1t, b1, w2, b2):
    h = jnp.tanh(x @ w1x + t * w1t + b1)
    ctrl = jnp.clip(h @ w2 + b2, -CLIP_MODEL, CLIP_MODEL)
    prior_s = -x / (SIGMA_PRIOR ** 2)
    target_s = -(x - MU_TARGET) / (SIGMA_TARGET ** 2)
    interp = prior_s + (t / TERMINAL_T) * (target_s - prior_s)
    score = SCALE_SCORE * jnp.clip(interp, -CLIP_SCORE, CLIP_SCORE)
    return ctrl + SIGMA_DIFF * score


if __name__ == "__main__":
    key = jax.random.PRNGKey(0)
    k_x, k_t, k_w1, k_b1, k_w2, k_b2 = jax.random.split(key, 6)

    # deterministic synthetic parameters for base_model (concat(x,t) -> H -> D)
    w1_full = jax.random.normal(k_w1, (D + 1, H), jnp.float32) * (1.0 / jnp.sqrt(D + 1))
    w1x = w1_full[:D, :]                                   # (D, H)
    w1t = w1_full[D:, :]                                   # (1, H)
    b1 = jax.random.normal(k_b1, (1, H), jnp.float32) * 0.01
    w2 = jax.random.normal(k_w2, (H, D), jnp.float32) * (1.0 / jnp.sqrt(H))
    b2 = jax.random.normal(k_b2, (1, D), jnp.float32) * 0.01

    # inputs
    x = jax.random.normal(k_x, (B, D), jnp.float32)
    t = jax.random.uniform(k_t, (B, 1), jnp.float32) * TERMINAL_T

    out = lerp_ctrl_forward_jit(t, x, w1x, w1t, b1, w2, b2)
    out = jax.block_until_ready(out)

    ref = lerp_ctrl_reference(t, x, w1x, w1t, b1, w2, b2)
    assert out.shape == (B, D)
    assert jnp.allclose(out, ref, atol=1e-3, rtol=1e-3), "mismatch vs JAX reference"

    print("KERNEL_OK")
</pallas_src>

<mosaic_0001>
module attributes {stable_mosaic.version = 11 : i64} {
  func.func @lerp_ctrl_kernel(%arg0: i32, %arg1: memref<16x1xf32, #tpu.memory_space<vmem>>, %arg2: memref<16x32xf32, #tpu.memory_space<vmem>>, %arg3: memref<32x64xf32, #tpu.memory_space<vmem>>, %arg4: memref<1x64xf32, #tpu.memory_space<vmem>>, %arg5: memref<1x64xf32, #tpu.memory_space<vmem>>, %arg6: memref<64x32xf32, #tpu.memory_space<vmem>>, %arg7: memref<1x32xf32, #tpu.memory_space<vmem>>, %arg8: memref<16x32xf32, #tpu.memory_space<vmem>>) attributes {dimension_semantics = [#tpu.dimension_semantics<parallel>], iteration_bounds = array<i64: 1>, scalar_prefetch = 0 : i64, scratch_operands = 0 : i64, tpu.core_type = #tpu.core_type<tc>, window_params = [{transform_indices = @transform_0, window_bounds = array<i64: 16, 1>}, {transform_indices = @transform_1, window_bounds = array<i64: 16, 32>}, {pipeline_mode = #tpu.pipeline_mode<synchronous>, transform_indices = @transform_2, window_bounds = array<i64: 32, 64>}, {pipeline_mode = #tpu.pipeline_mode<synchronous>, transform_indices = @transform_3, window_bounds = array<i64: 1, 64>}, {pipeline_mode = #tpu.pipeline_mode<synchronous>, transform_indices = @transform_4, window_bounds = array<i64: 1, 64>}, {pipeline_mode = #tpu.pipeline_mode<synchronous>, transform_indices = @transform_5, window_bounds = array<i64: 64, 32>}, {pipeline_mode = #tpu.pipeline_mode<synchronous>, transform_indices = @transform_6, window_bounds = array<i64: 1, 32>}, {transform_indices = @transform_7, window_bounds = array<i64: 16, 32>}]} {
    %c0 = arith.constant 0 : index
    %c0_0 = arith.constant 0 : index
    %0 = vector.load %arg1[%c0, %c0_0] : memref<16x1xf32, #tpu.memory_space<vmem>>, vector<16x1xf32>
    %c0_1 = arith.constant 0 : index
    %c0_2 = arith.constant 0 : index
    %1 = vector.load %arg2[%c0_1, %c0_2] : memref<16x32xf32, #tpu.memory_space<vmem>>, vector<16x32xf32>
    %c0_3 = arith.constant 0 : index
    %c0_4 = arith.constant 0 : index
    %2 = vector.load %arg3[%c0_3, %c0_4] : memref<32x64xf32, #tpu.memory_space<vmem>>, vector<32x64xf32>
    %cst = arith.constant dense<0.000000e+00> : vector<16x64xf32>
    %3 = tpu.matmul %1, %2, %cst {dimension_numbers = #tpu.dot_dimension_numbers<[1], [0], [0], [1], [0, 0, 1, 1], [], []>} : vector<16x32xf32>, vector<32x64xf32>, vector<16x64xf32> -> vector<16x64xf32>
    %c0_5 = arith.constant 0 : index
    %c0_6 = arith.constant 0 : index
    %4 = vector.load %arg4[%c0_5, %c0_6] : memref<1x64xf32, #tpu.memory_space<vmem>>, vector<1x64xf32>
    %5 = vector.broadcast %0 : vector<16x1xf32> to vector<16x64xf32>
    %6 = vector.broadcast %4 : vector<1x64xf32> to vector<16x64xf32>
    %7 = arith.mulf %5, %6 : vector<16x64xf32>
    %8 = arith.addf %3, %7 : vector<16x64xf32>
    %c0_7 = arith.constant 0 : index
    %c0_8 = arith.constant 0 : index
    %9 = vector.load %arg5[%c0_7, %c0_8] : memref<1x64xf32, #tpu.memory_space<vmem>>, vector<1x64xf32>
    %10 = vector.broadcast %9 : vector<1x64xf32> to vector<16x64xf32>
    %11 = arith.addf %8, %10 : vector<16x64xf32>
    %12 = math.tanh %11 : vector<16x64xf32>
    %c0_9 = arith.constant 0 : index
    %c0_10 = arith.constant 0 : index
    %13 = vector.load %arg6[%c0_9, %c0_10] : memref<64x32xf32, #tpu.memory_space<vmem>>, vector<64x32xf32>
    %cst_11 = arith.constant dense<0.000000e+00> : vector<16x32xf32>
    %14 = tpu.matmul %12, %13, %cst_11 {dimension_numbers = #tpu.dot_dimension_numbers<[1], [0], [0], [1], [0, 0, 1, 1], [], []>} : vector<16x64xf32>, vector<64x32xf32>, vector<16x32xf32> -> vector<16x32xf32>
    %c0_12 = arith.constant 0 : index
    %c0_13 = arith.constant 0 : index
    %15 = vector.load %arg7[%c0_12, %c0_13] : memref<1x32xf32, #tpu.memory_space<vmem>>, vector<1x32xf32>
    %16 = vector.broadcast %15 : vector<1x32xf32> to vector<16x32xf32>
    %17 = arith.addf %14, %16 : vector<16x32xf32>
    %cst_14 = arith.constant -5.000000e+00 : f32
    %cst_15 = arith.constant 5.000000e+00 : f32
    %18 = vector.broadcast %cst_14 : f32 to vector<16x32xf32>
    %19 = arith.maximumf %18, %17 : vector<16x32xf32>
    %20 = vector.broadcast %cst_15 : f32 to vector<16x32xf32>
    %21 = arith.minimumf %20, %19 : vector<16x32xf32>
    %cst_16 = arith.constant 0.000000e+00 : f32
    %22 = vector.broadcast %cst_16 : f32 to vector<16x32xf32>
    %23 = arith.subf %22, %1 : vector<16x32xf32>
    %cst_17 = arith.constant 1.000000e+00 : f32
    %24 = vector.broadcast %cst_17 : f32 to vector<16x32xf32>
    %25 = arith.mulf %23, %24 : vector<16x32xf32>
    %cst_18 = arith.constant 3.000000e-01 : f32
    %26 = vector.broadcast %cst_18 : f32 to vector<16x32xf32>
    %27 = arith.subf %1, %26 : vector<16x32xf32>
    %cst_19 = arith.constant 0.000000e+00 : f32
    %28 = vector.broadcast %cst_19 : f32 to vector<16x32xf32>
    %29 = arith.subf %28, %27 : vector<16x32xf32>
    %cst_20 = arith.constant 4.000000e+00 : f32
    %30 = vector.broadcast %cst_20 : f32 to vector<16x32xf32>
    %31 = arith.mulf %29, %30 : vector<16x32xf32>
    %cst_21 = arith.constant 1.000000e+00 : f32
    %32 = vector.broadcast %cst_21 : f32 to vector<16x1xf32>
    %33 = arith.mulf %0, %32 : vector<16x1xf32>
    %34 = arith.subf %31, %25 : vector<16x32xf32>
    %35 = vector.broadcast %33 : vector<16x1xf32> to vector<16x32xf32>
    %36 = arith.mulf %35, %34 : vector<16x32xf32>
    %37 = arith.addf %25, %36 : vector<16x32xf32>
    %cst_22 = arith.constant -1.000000e+01 : f32
    %cst_23 = arith.constant 1.000000e+01 : f32
    %38 = vector.broadcast %cst_22 : f32 to vector<16x32xf32>
    %39 = arith.maximumf %38, %37 : vector<16x32xf32>
    %40 = vector.broadcast %cst_23 : f32 to vector<16x32xf32>
    %41 = arith.minimumf %40, %39 : vector<16x32xf32>
    %cst_24 = arith.constant 1.000000e+00 : f32
    %42 = vector.broadcast %cst_24 : f32 to vector<16x32xf32>
    %43 = arith.mulf %42, %41 : vector<16x32xf32>
    %cst_25 = arith.constant 1.41421354 : f32
    %44 = vector.broadcast %cst_25 : f32 to vector<16x32xf32>
    %45 = arith.mulf %44, %43 : vector<16x32xf32>
    %46 = arith.addf %21, %45 : vector<16x32xf32>
    %c0_26 = arith.constant 0 : index
    %c0_27 = arith.constant 0 : index
    %47 = vector.load %arg8[%c0_26, %c0_27] : memref<16x32xf32, #tpu.memory_space<vmem>>, vector<16x32xf32>
    tpu.vector_store %arg8[%c0_26, %c0_27], %46 {strides = array<i32>} : memref<16x32xf32, #tpu.memory_space<vmem>>, vector<16x32xf32>,
    return
  }
  func.func @transform_0(%arg0: i32) -> (i32, i32) {
    %c0_i32 = arith.constant 0 : i32
    %c0_i32_0 = arith.constant 0 : i32
    return %arg0, %c0_i32 : i32, i32
  }
  func.func @transform_1(%arg0: i32) -> (i32, i32) {
    %c0_i32 = arith.constant 0 : i32
    %c0_i32_0 = arith.constant 0 : i32
    return %arg0, %c0_i32 : i32, i32
  }
  func.func @transform_2(%arg0: i32) -> (i32, i32) {
    %c0_i32 = arith.constant 0 : i32
    %c0_i32_0 = arith.constant 0 : i32
    %c0_i32_1 = arith.constant 0 : i32
    return %c0_i32, %c0_i32_0 : i32, i32
  }
  func.func @transform_3(%arg0: i32) -> (i32, i32) {
    %c0_i32 = arith.constant 0 : i32
    %c0_i32_0 = arith.constant 0 : i32
    %c0_i32_1 = arith.constant 0 : i32
    return %c0_i32, %c0_i32_0 : i32, i32
  }
  func.func @transform_4(%arg0: i32) -> (i32, i32) {
    %c0_i32 = arith.constant 0 : i32
    %c0_i32_0 = arith.constant 0 : i32
    %c0_i32_1 = arith.constant 0 : i32
    return %c0_i32, %c0_i32_0 : i32, i32
  }
  func.func @transform_5(%arg0: i32) -> (i32, i32) {
    %c0_i32 = arith.constant 0 : i32
    %c0_i32_0 = arith.constant 0 : i32
    %c0_i32_1 = arith.constant 0 : i32
    return %c0_i32, %c0_i32_0 : i32, i32
  }
  func.func @transform_6(%arg0: i32) -> (i32, i32) {
    %c0_i32 = arith.constant 0 : i32
    %c0_i32_0 = arith.constant 0 : i32
    %c0_i32_1 = arith.constant 0 : i32
    return %c0_i32, %c0_i32_0 : i32, i32
  }
  func.func @transform_7(%arg0: i32) -> (i32, i32) {
    %c0_i32 = arith.constant 0 : i32
    %c0_i32_0 = arith.constant 0 : i32
    return %arg0, %c0_i32 : i32, i32
  }
}

</mosaic_0001>

<llo_original>
// kernel: lerp_ctrl_forward.1
$region0: #{lerp_ctrl_forward.1}
  #allocation0 [shape = 'u32[]', space=smem, size = 0x4, offset = 0x4, fixed_abs, tag = 'smem constant byte address 0x4 - core index']
  #allocation1 [shape = 'u32[144,128]{1,0:T(1,128)}', space=vmem, size = 0x12000, scoped, tag = 'internal scratch']
  %s0 = inlined_call_operand.vmem [shape: f32[16,1], index: 0, kind: input, shape index: {}]
  %s1 = inlined_call_operand.vmem [shape: f32[16,32], index: 1, kind: input, shape index: {}]
  %s2 = inlined_call_operand.vmem [shape: f32[32,64], index: 2, kind: input, shape index: {}]
  %s3 = inlined_call_operand.vmem [shape: f32[1,64], index: 3, kind: input, shape index: {}]
  %s4 = inlined_call_operand.vmem [shape: f32[1,64], index: 4, kind: input, shape index: {}]
  %s5 = inlined_call_operand.vmem [shape: f32[64,32], index: 5, kind: input, shape index: {}]
  %s6 = inlined_call_operand.vmem [shape: f32[1,32], index: 6, kind: input, shape index: {}]
  %s7 = inlined_call_operand.hbm [shape: f32[16,32], index: 7, kind: output, shape index: {}]
  %s8 = sld [smem:[#allocation0]]
  $region38: #{lerp_ctrl_forward.1} parent=0
    _
  %s10 = ssub.s32 1, %s8
  %s11 = scalar_select 0, %s10, %s8
  $region1: #{lerp_ctrl_forward.1} parent=0
    #allocation2 [shape = 'u8[8192]{0}', space=vmem, size = 0x2000, scoped, tag = 'output window, operand 0, single buffered']
    #allocation3 [shape = 's32[1]{0}', space=sflag, size = 0x4, scoped, tag = 'scoped memory for lerp_ctrl_forward.1']
    %12 = vsyncpa [#allocation3], 0
    // Predicated region
    $region2: #{lerp_ctrl_forward.1} parent=1 // pred_check
      _
    $region3: #{lerp_ctrl_forward.1} parent=1 // pred_check_branch
      %14 = sbr.rel (0) target = $region5
    $region4: #{lerp_ctrl_forward.1} parent=1 // pred_region
      _
    $region5: #{lerp_ctrl_forward.1} parent=1 // pred_fallthru
      _
    // Predicated region
    $region6: #{lerp_ctrl_forward.1} parent=1 // pred_check
      _
    $region7: #{lerp_ctrl_forward.1} parent=1 // pred_check_branch
      %16 = sbr.rel (0) target = $region9
    $region8: #{lerp_ctrl_forward.1} parent=1 // pred_region
      _
    $region9: #{lerp_ctrl_forward.1} parent=1 // pred_fallthru
      _
    // Predicated region
    $region10: #{lerp_ctrl_forward.1} parent=1 // pred_check
      _
    $region11: #{lerp_ctrl_forward.1} parent=1 // pred_check_branch
      %18 = sbr.rel (0) target = $region13
    $region12: #{lerp_ctrl_forward.1} parent=1 // pred_region
      _
    $region13: #{lerp_ctrl_forward.1} parent=1 // pred_fallthru
      _
    // Predicated region
    $region14: #{lerp_ctrl_forward.1} parent=1 // pred_check
      _
    $region15: #{lerp_ctrl_forward.1} parent=1 // pred_check_branch
      %20 = sbr.rel (0) target = $region17
    $region16: #{lerp_ctrl_forward.1} parent=1 // pred_region
      _
    $region17: #{lerp_ctrl_forward.1} parent=1 // pred_fallthru
      _
    // Predicated region
    $region18: #{lerp_ctrl_forward.1} parent=1 // pred_check
      _
    $region19: #{lerp_ctrl_forward.1} parent=1 // pred_check_branch
      %22 = sbr.rel (0) target = $region21
    $region20: #{lerp_ctrl_forward.1} parent=1 // pred_region
      _
    $region21: #{lerp_ctrl_forward.1} parent=1 // pred_fallthru
      _
    // Predicated region
    $region22: #{lerp_ctrl_forward.1} parent=1 // pred_check
      _
    $region23: #{lerp_ctrl_forward.1} parent=1 // pred_check_branch
      %24 = sbr.rel (0) target = $region25
    $region24: #{lerp_ctrl_forward.1} parent=1 // pred_region
      _
    $region25: #{lerp_ctrl_forward.1} parent=1 // pred_fallthru
      _
    // Predicated region
    $region26: #{lerp_ctrl_forward.1} parent=1 // pred_check
      _
    $region27: #{lerp_ctrl_forward.1} parent=1 // pred_check_branch
      %26 = sbr.rel (0) target = $region29
    $region28: #{lerp_ctrl_forward.1} parent=1 // pred_region
      _
    $region29: #{lerp_ctrl_forward.1} parent=1 // pred_fallthru
      _
    %v27 = vld [vmem:[%s0] sm:$0xff]
    %v28 = vld [vmem:[%s0 + $0x8] sm:$0xff]
    %v29 = vld [vmem:[%s1] sm:$0xff]
    %v30 = vld [vmem:[%s1 + $0x8] sm:$0xff]
    %v31 = vld [vmem:[%s2] sm:$0xff]
    %v32 = vld [vmem:[%s2 + $0x8] sm:$0xff]
    %v33 = vld [vmem:[%s2 + $0x10] sm:$0xff]
    %v34 = vld [vmem:[%s2 + $0x18] sm:$0xff]
    %v35 = vld [vmem:[%s3] sm:$0x1]
    %37 = vset.pattern.permute.xlu0 0
    %38 = vperm.xlu0 %37, %v27
    %v39 = vpop.permute.xlu0 %38
    %42 = vset.pattern.permute.xlu0 0
    %43 = vperm.xlu0 %42, %v28
    %v44 = vpop.permute.xlu0 %43
    %v47 = vlaneseq
    %v48 = vshrl.u32 %v47, 7
    %v49 = vsub.s32 0, %v48
    %v50 = vrot.slane %v35, %v49
    %v52 = vmul.f32 %v39, %v50
    %v53 = vmul.f32 %v44, %v50
    %vm54 = vcmask 261120
    %v56 = vsel %vm54, %v29, 0
    %v59 = vsel %vm54, %v30, 0
    %61 = vmatprep.subr.mxu0 0.0
    %62 = vmatpush1.msra.mxu0 0.0
    %63 = vmatprep.subr.mxu0 0.0
    %64 = vmatpush1.msra.mxu0 0.0
    %65 = vmatprep.subr.mxu0 0.0
    %66 = vmatpush1.msra.mxu0 0.0
    %67 = vmatprep.subr.mxu0 0.0
    %68 = vmatpush1.msra.mxu0 0.0
    %69 = vmatprep.subr.mxu0 0.0
    %70 = vmatpush1.msra.mxu0 0.0
    %71 = vmatprep.subr.mxu0 0.0
    %72 = vmatpush1.msra.mxu0 0.0
    %73 = vmatprep.subr.mxu0 0.0
    %74 = vmatpush1.msra.mxu0 0.0
    %75 = vmatprep.subr.mxu0 0.0
    %76 = vmatpush1.msra.mxu0 0.0
    %77 = vmatprep.subr.mxu0 0.0
    %78 = vmatpush1.msra.mxu0 0.0
    %79 = vmatprep.subr.mxu0 0.0
    %80 = vmatpush1.msra.mxu0 0.0
    %81 = vmatprep.subr.mxu0 0.0
    %82 = vmatpush1.msra.mxu0 0.0
    %83 = vmatprep.subr.mxu0 0.0
    %84 = vmatpush1.msra.mxu0 0.0
    %85 = vmatprep.subr.mxu0 0.0
    %86 = vmatpush1.msra.mxu0 %v34
    %87 = vmatprep.subr.mxu0 0.0
    %88 = vmatpush1.msra.mxu0 %v33
    %89 = vmatprep.subr.mxu0 0.0
    %90 = vmatpush1.msra.mxu0 %v32
    %91 = vmatprep.subr.mxu0 0.0
    %92 = vmatpush1.msra.mxu0 %v31
    %93 = vmatprep.subr.mxu0 0.0
    %94 = vmatpush2.msra.mxu0 0.0
    %95 = vmatprep.subr.mxu0 0.0
    %96 = vmatpush2.msra.mxu0 0.0
    %97 = vmatprep.subr.mxu0 0.0
    %98 = vmatpush2.msra.mxu0 0.0
    %99 = vmatprep.subr.mxu0 0.0
    %100 = vmatpush2.msra.mxu0 0.0
    %101 = vmatprep.subr.mxu0 0.0
    %102 = vmatpush2.msra.mxu0 0.0
    %103 = vmatprep.subr.mxu0 0.0
    %104 = vmatpush2.msra.mxu0 0.0
    %105 = vmatprep.subr.mxu0 0.0
    %106 = vmatpush2.msra.mxu0 0.0
    %107 = vmatprep.subr.mxu0 0.0
    %108 = vmatpush2.msra.mxu0 0.0
    %109 = vmatprep.subr.mxu0 0.0
    %110 = vmatpush2.msra.mxu0 0.0
    %111 = vmatprep.subr.mxu0 0.0
    %112 = vmatpush2.msra.mxu0 0.0
    %113 = vmatprep.subr.mxu0 0.0
    %114 = vmatpush2.msra.mxu0 0.0
    %115 = vmatprep.subr.mxu0 0.0
    %116 = vmatpush2.msra.mxu0 0.0
    %117 = vmatprep.subr.mxu0 0.0
    %118 = vmatpush2.msra.mxu0 0.0
    %119 = vmatprep.subr.mxu0 0.0
    %120 = vmatpush2.msra.mxu0 0.0
    %121 = vmatprep.subr.mxu0 0.0
    %122 = vmatpush2.msra.mxu0 0.0
    %123 = vmatprep.subr.mxu0 0.0
    %124 = vmatpush2.msra.mxu0 0.0
    %125 = vmatprep.mubr.f32.mxu0 0.0
    %126 = vmatmul.mubr.f32.gmra.mxu0 %v56
    %v127 = vpop.f32.mrf.mxu0
    %v128 = vadd.f32 %v52, %v127
    %v129 = vpop.f32.mrf.mxu0
    %130 = vmatprep.mubr.f32.mxu0 0.0
    %131 = vmatmul.mubr.f32.gmra.mxu0 %v59
    %v132 = vpop.f32.mrf.mxu0
    %v133 = vadd.f32 %v53, %v132
    %v134 = vpop.f32.mrf.mxu0
    %135 = vdwg.mxu0
    %v136 = vld [vmem:[%s4] sm:$0x1]
    %v138 = vlaneseq
    %v139 = vshrl.u32 %v138, 7
    %v140 = vsub.s32 0, %v139
    %v141 = vrot.slane %v136, %v140
    %v143 = vadd.f32 %v128, %v141
    %v144 = vadd.f32 %v133, %v141
    %v145 = vtanh.pop %v143
    %v146 = vtanh.pop %v144
    %v147 = vld [vmem:[%s5] sm:$0xff]
    %v148 = vld [vmem:[%s5 + $0x8] sm:$0xff]
    %v149 = vld [vmem:[%s5 + $0x10] sm:$0xff]
    %v150 = vld [vmem:[%s5 + $0x18] sm:$0xff]
    %v151 = vld [vmem:[%s5 + $0x20] sm:$0xff]
    %v152 = vld [vmem:[%s5 + $0x28] sm:$0xff]
    %v153 = vld [vmem:[%s5 + $0x30] sm:$0xff]
    %v154 = vld [vmem:[%s5 + $0x38] sm:$0xff]
    %v155 = vld [vmem:[%s6] sm:$0x1]
    %v157 = vlaneseq
    %v158 = vshrl.u32 %v157, 7
    %v159 = vsub.s32 0, %v158
    %v160 = vrot.slane %v155, %v159
    %vm162 = vcmask 523264
    %v164 = vsel %vm162, %v145, 0
    %v167 = vsel %vm162, %v146, 0
    %169 = vmatprep.subr.mxu0 0.0
    %170 = vmatpush1.msra.mxu0 0.0
    %171 = vmatprep.subr.mxu0 0.0
    %172 = vmatpush1.msra.mxu0 0.0
    %173 = vmatprep.subr.mxu0 0.0
    %174 = vmatpush1.msra.mxu0 0.0
    %175 = vmatprep.subr.mxu0 0.0
    %176 = vmatpush1.msra.mxu0 0.0
    %177 = vmatprep.subr.mxu0 0.0
    %178 = vmatpush1.msra.mxu0 0.0
    %179 = vmatprep.subr.mxu0 0.0
    %180 = vmatpush1.msra.mxu0 0.0
    %181 = vmatprep.subr.mxu0 0.0
    %182 = vmatpush1.msra.mxu0 0.0
    %183 = vmatprep.subr.mxu0 0.0
    %184 = vmatpush1.msra.mxu0 0.0
    %185 = vmatprep.subr.mxu0 0.0
    %186 = vmatpush1.msra.mxu0 %v154
    %187 = vmatprep.subr.mxu0 0.0
    %188 = vmatpush1.msra.mxu0 %v153
    %189 = vmatprep.subr.mxu0 0.0
    %190 = vmatpush1.msra.mxu0 %v152
    %191 = vmatprep.subr.mxu0 0.0
    %192 = vmatpush1.msra.mxu0 %v151
    %193 = vmatprep.subr.mxu0 0.0
    %194 = vmatpush1.msra.mxu0 %v150
    %195 = vmatprep.subr.mxu0 0.0
    %196 = vmatpush1.msra.mxu0 %v149
    %197 = vmatprep.subr.mxu0 0.0
    %198 = vmatpush1.msra.mxu0 %v148
    %199 = vmatprep.subr.mxu0 0.0
    %200 = vmatpush1.msra.mxu0 %v147
    %201 = vmatprep.subr.mxu0 0.0
    %202 = vmatpush2.msra.mxu0 0.0
    %203 = vmatprep.subr.mxu0 0.0
    %204 = vmatpush2.msra.mxu0 0.0
    %205 = vmatprep.subr.mxu0 0.0
    %206 = vmatpush2.msra.mxu0 0.0
    %207 = vmatprep.subr.mxu0 0.0
    %208 = vmatpush2.msra.mxu0 0.0
    %209 = vmatprep.subr.mxu0 0.0
    %210 = vmatpush2.msra.mxu0 0.0
    %211 = vmatprep.subr.mxu0 0.0
    %212 = vmatpush2.msra.mxu0 0.0
    %213 = vmatprep.subr.mxu0 0.0
    %214 = vmatpush2.msra.mxu0 0.0
    %215 = vmatprep.subr.mxu0 0.0
    %216 = vmatpush2.msra.mxu0 0.0
    %217 = vmatprep.subr.mxu0 0.0
    %218 = vmatpush2.msra.mxu0 0.0
    %219 = vmatprep.subr.mxu0 0.0
    %220 = vmatpush2.msra.mxu0 0.0
    %221 = vmatprep.subr.mxu0 0.0
    %222 = vmatpush2.msra.mxu0 0.0
    %223 = vmatprep.subr.mxu0 0.0
    %224 = vmatpush2.msra.mxu0 0.0
    %225 = vmatprep.subr.mxu0 0.0
    %226 = vmatpush2.msra.mxu0 0.0
    %227 = vmatprep.subr.mxu0 0.0
    %228 = vmatpush2.msra.mxu0 0.0
    %229 = vmatprep.subr.mxu0 0.0
    %230 = vmatpush2.msra.mxu0 0.0
    %231 = vmatprep.subr.mxu0 0.0
    %232 = vmatpush2.msra.mxu0 0.0
    %233 = vmatprep.mubr.f32.mxu0 0.0
    %234 = vmatmul.mubr.f32.gmra.mxu0 %v164
    %v235 = vpop.f32.mrf.mxu0
    %v236 = vadd.f32 %v160, %v235
    %v237 = vpop.f32.mrf.mxu0
    %238 = vmatprep.mubr.f32.mxu0 0.0
    %239 = vmatmul.mubr.f32.gmra.mxu0 %v167
    %v240 = vpop.f32.mrf.mxu0
    %v241 = vadd.f32 %v160, %v240
    %v242 = vpop.f32.mrf.mxu0
    %243 = vdwg.mxu0
    %v244 = vmax.f32 %v236, -5.0
    %v245 = vmax.f32 %v241, -5.0
    %v246 = vmin.f32 %v244, 5.0
    %v247 = vmin.f32 %v245, 5.0
    %v248 = vsub.f32 0.0, %v29
    %v249 = vsub.f32 0.0, %v30
    %v250 = vsub.f32 %v29, 0.3
    %v251 = vsub.f32 %v30, 0.3
    %v252 = vsub.f32 0.0, %v250
    %v253 = vsub.f32 0.0, %v251
    %v254 = vmul.f32 %v252, 4.0
    %v255 = vmul.f32 %v253, 4.0
    %v256 = vsub.f32 %v254, %v248
    %v257 = vsub.f32 %v255, %v249
    %v258 = vmul.f32 %v39, %v256
    %v259 = vmul.f32 %v44, %v257
    %v260 = vadd.f32 %v248, %v258
    %v261 = vadd.f32 %v249, %v259
    %v262 = vmax.f32 %v260, -10.0
    %v263 = vmax.f32 %v261, -10.0
    %v264 = vmin.f32 %v262, 10.0
    %v265 = vmin.f32 %v263, 10.0
    %v266 = vmul.f32 %v264, 1.4142135
    %v267 = vmul.f32 %v265, 1.4142135
    %v268 = vadd.f32 %v246, %v266
    %v269 = vadd.f32 %v247, %v267
    %270 = vst.msk [vmem:[#allocation2] sm:$0xff] %vm54, %v268
    %271 = vst.msk [vmem:[#allocation2 + $0x8] sm:$0xff] %vm54, %v269
    // Predicated region
    $region30: #{lerp_ctrl_forward.1} parent=1 // pred_check
      _
    $region31: #{lerp_ctrl_forward.1} parent=1 // pred_check_branch
      %273 = sbr.rel (0) target = $region33
    $region32: #{lerp_ctrl_forward.1} parent=1 // pred_region
      %s275 = ssub.s32 256, 256
      %276 = vsyncadd [#allocation3], %s275
      %s277 = sshll.u32 [#allocation2], 4
      %s278 = int_to_ptr.vmem [resolvable:$true] %s277
      %283 = dma.vmem_to_hbm [thread:$0]  %s278, 256, %s7, [#allocation3], 128, 128, 8
    $region33: #{lerp_ctrl_forward.1} parent=1 // pred_fallthru
      _
    // Predicated region
    $region34: #{lerp_ctrl_forward.1} parent=1 // pred_check
      _
    $region35: #{lerp_ctrl_forward.1} parent=1 // pred_check_branch
      %285 = sbr.rel (0) target = $region37
    $region36: #{lerp_ctrl_forward.1} parent=1 // pred_region
      %286 = dma.done [#allocation3], 256
    $region37: #{lerp_ctrl_forward.1} parent=1 // pred_fallthru
      _
    %287 = vsyncpa [#allocation3], 1

</llo_original>
